<compile_context>
chip_gen: v5e
topology: v5e:2x2
jax: 0.10.0
libtpu: 0.0.40
codegen_flags: <defaults>
</compile_context>

<pallas_src>
import jax
import jax.numpy as jnp
from jax.experimental import pallas as pl
from jax.experimental.pallas import tpu as pltpu


def _round_up(n, m):
    return ((n + m - 1) // m) * m


def _choose_tb(batch, block_b):
    # Small batch: one full-array block (block dim == array dim is always a
    # legal block shape; no ragged handling, no padding).
    if batch <= 512:
        return batch
    # Large batch: 16-row-aligned tile (bf16 sublane pack), capped at block_b,
    # sized so the 1-D "parallel" grid has at least 2 steps (v7x megacore).
    tb = min(block_b, _round_up((batch + 1) // 2, 16))
    return max(tb, 16)


def _linear_softmax_kernel(x_ref, w_ref, b_ref, o_ref):
    # Cast activations to bf16 in-kernel (avoids a separate XLA pass over x);
    # MXU matmul with f32 accumulation, bias add in f32.
    xb = x_ref[...].astype(jnp.bfloat16)
    logits = jnp.dot(xb, w_ref[...], preferred_element_type=jnp.float32)
    logits = logits + b_ref[...]
    # Numerically-stable softmax along dim=-1, exact f32 normalization.
    m = jnp.max(logits, axis=-1, keepdims=True)
    e = jnp.exp(logits - m)
    s = jnp.sum(e, axis=-1, keepdims=True)
    o_ref[...] = (e * (1.0 / s)).astype(o_ref.dtype)


def resnet_top_forward(x, w, b, *, block_b=1024):
    """x: (B, F) f32, w: (F, C) f32, b: (C,) f32 -> (B, C) softmax probs (f32)."""
    B, F = x.shape
    C = w.shape[1]

    wb = w.astype(jnp.bfloat16)             # tiny one-time (F*C) cast; VMEM-resident
    b2 = b.reshape(1, C).astype(jnp.float32)

    TB = _choose_tb(B, block_b)
    grid = (pl.cdiv(B, TB),)

    cost = pl.CostEstimate(
        flops=2 * B * F * C,
        transcendentals=B * C,
        bytes_accessed=B * F * 4 + F * C * 2 + C * 4 + B * C * 4,
    )

    return pl.pallas_call(
        _linear_softmax_kernel,
        out_shape=jax.ShapeDtypeStruct((B, C), jnp.float32),
        grid_spec=pltpu.PrefetchScalarGridSpec(
            num_scalar_prefetch=0,
            grid=grid,
            in_specs=[
                pl.BlockSpec((TB, F), lambda i: (i, 0)),   # pipelined x tiles
                pl.BlockSpec((F, C), lambda i: (0, 0)),    # W: VMEM-resident
                pl.BlockSpec((1, C), lambda i: (0, 0)),    # bias: VMEM-resident
            ],
            out_specs=pl.BlockSpec((TB, C), lambda i: (i, 0)),
        ),
        compiler_params=pltpu.CompilerParams(
            dimension_semantics=("parallel",),             # megacore on v7x
        ),
        cost_estimate=cost,
    )(x, wb, b2)


def init_params(key, in_features, num_classes):
    """Deterministic nn.Linear-style init: U(-1/sqrt(fan_in), 1/sqrt(fan_in))."""
    kw, kb = jax.random.split(key)
    bound = 1.0 / jnp.sqrt(jnp.float32(in_features))
    # Stored as (in_features, out_features) == torch weight (out, in) transposed.
    w = jax.random.uniform(kw, (in_features, num_classes), jnp.float32, -bound, bound)
    b = jax.random.uniform(kb, (num_classes,), jnp.float32, -bound, bound)
    return w, b


if __name__ == "__main__":
    # resnet18's fc sees 512-wide pooled features; CUB has 200 classes.
    B, F, C = 2, 512, 200

    key = jax.random.PRNGKey(0)
    kx, kp = jax.random.split(key)
    x = jax.random.normal(kx, (B, F), jnp.float32)
    w, b = init_params(kp, F, C)

    out = resnet_top_forward(x, w, b)
    out = jax.block_until_ready(out)
    assert out.shape == (B, C)

    # Reference with matching matmul precision (bf16 inputs, f32 accumulation).
    ref_logits = jnp.dot(x.astype(jnp.bfloat16), w.astype(jnp.bfloat16),
                         preferred_element_type=jnp.float32) + b
    ref = jax.nn.softmax(ref_logits, axis=-1)
    assert jnp.allclose(out, ref, atol=1e-4, rtol=1e-3), \
        float(jnp.max(jnp.abs(out - ref)))

    # Also close to the full-f32 torch-equivalent reference.
    ref_f32 = jax.nn.softmax(x @ w + b, axis=-1)
    assert jnp.allclose(out, ref_f32, atol=2e-3, rtol=5e-2)

    # Rows sum to 1 (exact-reciprocal normalization).
    assert jnp.allclose(jnp.sum(out, axis=-1), 1.0, atol=1e-3)

    print("KERNEL_OK")
</pallas_src>

<mosaic_0001>
module attributes {stable_mosaic.version = 11 : i64} {
  func.func @_linear_softmax_kernel(%arg0: i32, %arg1: memref<2x512xf32, #tpu.memory_space<vmem>>, %arg2: memref<512x200xbf16, #tpu.memory_space<vmem>>, %arg3: memref<1x200xf32, #tpu.memory_space<vmem>>, %arg4: memref<2x200xf32, #tpu.memory_space<vmem>>) attributes {dimension_semantics = [#tpu.dimension_semantics<parallel>], iteration_bounds = array<i64: 1>, scalar_prefetch = 0 : i64, scratch_operands = 0 : i64, tpu.core_type = #tpu.core_type<tc>, window_params = [{transform_indices = @transform_0, window_bounds = array<i64: 2, 512>}, {pipeline_mode = #tpu.pipeline_mode<synchronous>, transform_indices = @transform_1, window_bounds = array<i64: 512, 200>}, {pipeline_mode = #tpu.pipeline_mode<synchronous>, transform_indices = @transform_2, window_bounds = array<i64: 1, 200>}, {transform_indices = @transform_3, window_bounds = array<i64: 2, 200>}]} {
    %c0 = arith.constant 0 : index
    %c0_0 = arith.constant 0 : index
    %0 = vector.load %arg1[%c0, %c0_0] : memref<2x512xf32, #tpu.memory_space<vmem>>, vector<2x512xf32>
    %1 = arith.truncf %0 : vector<2x512xf32> to vector<2x512xbf16>
    %c0_1 = arith.constant 0 : index
    %c0_2 = arith.constant 0 : index
    %2 = vector.load %arg2[%c0_1, %c0_2] : memref<512x200xbf16, #tpu.memory_space<vmem>>, vector<512x200xbf16>
    %cst = arith.constant dense<0.000000e+00> : vector<2x200xf32>
    %3 = tpu.matmul %1, %2, %cst {dimension_numbers = #tpu.dot_dimension_numbers<[1], [0], [0], [1], [0, 0, 1, 1], [], []>} : vector<2x512xbf16>, vector<512x200xbf16>, vector<2x200xf32> -> vector<2x200xf32>
    %c0_3 = arith.constant 0 : index
    %c0_4 = arith.constant 0 : index
    %4 = vector.load %arg3[%c0_3, %c0_4] : memref<1x200xf32, #tpu.memory_space<vmem>>, vector<1x200xf32>
    %5 = vector.broadcast %4 : vector<1x200xf32> to vector<2x200xf32>
    %6 = arith.addf %3, %5 : vector<2x200xf32>
    %cst_5 = arith.constant dense<0xFF800000> : vector<2xf32>
    %7 = vector.multi_reduction <maximumf>, %6, %cst_5 [1] : vector<2x200xf32> to vector<2xf32>
    %8 = vector.shape_cast %7 : vector<2xf32> to vector<2x1xf32>
    %9 = vector.broadcast %8 : vector<2x1xf32> to vector<2x200xf32>
    %10 = arith.subf %6, %9 : vector<2x200xf32>
    %11 = math.exp %10 : vector<2x200xf32>
    %cst_6 = arith.constant dense<0.000000e+00> : vector<2xf32>
    %12 = vector.multi_reduction <add>, %11, %cst_6 [1] : vector<2x200xf32> to vector<2xf32>
    %13 = vector.shape_cast %12 : vector<2xf32> to vector<2x1xf32>
    %cst_7 = arith.constant 1.000000e+00 : f32
    %14 = vector.broadcast %cst_7 : f32 to vector<2x1xf32>
    %15 = arith.divf %14, %13 : vector<2x1xf32>
    %16 = vector.broadcast %15 : vector<2x1xf32> to vector<2x200xf32>
    %17 = arith.mulf %11, %16 : vector<2x200xf32>
    %c0_8 = arith.constant 0 : index
    %c0_9 = arith.constant 0 : index
    %18 = vector.load %arg4[%c0_8, %c0_9] : memref<2x200xf32, #tpu.memory_space<vmem>>, vector<2x200xf32>
    tpu.vector_store %arg4[%c0_8, %c0_9], %17 {strides = array<i32>} : memref<2x200xf32, #tpu.memory_space<vmem>>, vector<2x200xf32>,
    return
  }
  func.func @transform_0(%arg0: i32) -> (i32, i32) {
    %c0_i32 = arith.constant 0 : i32
    %c0_i32_0 = arith.constant 0 : i32
    return %arg0, %c0_i32 : i32, i32
  }
  func.func @transform_1(%arg0: i32) -> (i32, i32) {
    %c0_i32 = arith.constant 0 : i32
    %c0_i32_0 = arith.constant 0 : i32
    %c0_i32_1 = arith.constant 0 : i32
    return %c0_i32, %c0_i32_0 : i32, i32
  }
  func.func @transform_2(%arg0: i32) -> (i32, i32) {
    %c0_i32 = arith.constant 0 : i32
    %c0_i32_0 = arith.constant 0 : i32
    %c0_i32_1 = arith.constant 0 : i32
    return %c0_i32, %c0_i32_0 : i32, i32
  }
  func.func @transform_3(%arg0: i32) -> (i32, i32) {
    %c0_i32 = arith.constant 0 : i32
    %c0_i32_0 = arith.constant 0 : i32
    return %arg0, %c0_i32 : i32, i32
  }
}

</mosaic_0001>

<llo_original>
// kernel: tpu_custom_call.1
$region0: #{tpu_custom_call.1}
  #allocation0 [shape = 'u32[]', space=smem, size = 0x4, offset = 0x4, fixed_abs, tag = 'smem constant byte address 0x4 - core index']
  #allocation1 [shape = 'u32[72,128]{1,0:T(1,128)}', space=vmem, size = 0x9000, scoped, tag = 'internal scratch']
  %s0 = inlined_call_operand.vmem [shape: f32[2,512], index: 0, kind: input, shape index: {}]
  %s1 = inlined_call_operand.vmem [shape: bf16[512,200], index: 1, kind: input, shape index: {}]
  %s2 = inlined_call_operand.vmem [shape: f32[1,200], index: 2, kind: input, shape index: {}]
  %s3 = inlined_call_operand.hbm [shape: f32[2,200], index: 3, kind: output, shape index: {}]
  %s4 = sld [smem:[#allocation0]]
  $region22: #{tpu_custom_call.1} parent=0
    _
  %s6 = ssub.s32 1, %s4
  %s7 = scalar_select 0, %s6, %s4
  $region1: #{tpu_custom_call.1} parent=0
    #allocation2 [shape = 'u8[2048]{0}', space=vmem, size = 0x800, scoped, tag = 'output window, operand 0, single buffered']
    #allocation3 [shape = 's32[1]{0}', space=sflag, size = 0x4, scoped, tag = 'scoped memory for tpu_custom_call.1']
    %8 = vsyncpa [#allocation3], 0
    // Predicated region
    $region2: #{tpu_custom_call.1} parent=1 // pred_check
      _
    $region3: #{tpu_custom_call.1} parent=1 // pred_check_branch
      %10 = sbr.rel (0) target = $region5
    $region4: #{tpu_custom_call.1} parent=1 // pred_region
      _
    $region5: #{tpu_custom_call.1} parent=1 // pred_fallthru
      _
    // Predicated region
    $region6: #{tpu_custom_call.1} parent=1 // pred_check
      _
    $region7: #{tpu_custom_call.1} parent=1 // pred_check_branch
      %12 = sbr.rel (0) target = $region9
    $region8: #{tpu_custom_call.1} parent=1 // pred_region
      _
    $region9: #{tpu_custom_call.1} parent=1 // pred_fallthru
      _
    // Predicated region
    $region10: #{tpu_custom_call.1} parent=1 // pred_check
      _
    $region11: #{tpu_custom_call.1} parent=1 // pred_check_branch
      %14 = sbr.rel (0) target = $region13
    $region12: #{tpu_custom_call.1} parent=1 // pred_region
      _
    $region13: #{tpu_custom_call.1} parent=1 // pred_fallthru
      _
    %v15 = vld [vmem:[%s0] sm:$0xff]
    %17 = vst [vmem:[#allocation1] ss:$4 sm:$0xff] %v15
    %v18 = vld.sshfl [vmem:[#allocation1] sm:$0xff pattern:$0x73625140]
    %v19 = vld.sshfl [vmem:[#allocation1 + $0x8] sm:$0xff pattern:$0x73625140]
    %v20 = vld.sshfl [vmem:[#allocation1 + $0x10] sm:$0xff pattern:$0x73625140]
    %v21 = vld.sshfl [vmem:[#allocation1 + $0x18] sm:$0xff pattern:$0x73625140]
    %v26 = vpack.c.bf16 %v18, %v18
    %v27 = vpack.c.bf16 %v19, %v19
    %v28 = vpack.c.bf16 %v20, %v20
    %v29 = vpack.c.bf16 %v21, %v21
    %v30 = vld [vmem:[%s1] sm:$0xff]
    %v31 = vld [vmem:[%s1 + $0x8] sm:$0xff]
    %v32 = vld [vmem:[%s1 + $0x10] sm:$0xff]
    %v33 = vld [vmem:[%s1 + $0x18] sm:$0xff]
    %v34 = vld [vmem:[%s1 + $0x20] sm:$0xff]
    %v35 = vld [vmem:[%s1 + $0x28] sm:$0xff]
    %v36 = vld [vmem:[%s1 + $0x30] sm:$0xff]
    %v37 = vld [vmem:[%s1 + $0x38] sm:$0xff]
    %v38 = vld [vmem:[%s1 + $0x40] sm:$0xff]
    %v39 = vld [vmem:[%s1 + $0x48] sm:$0xff]
    %v40 = vld [vmem:[%s1 + $0x50] sm:$0xff]
    %v41 = vld [vmem:[%s1 + $0x58] sm:$0xff]
    %v42 = vld [vmem:[%s1 + $0x60] sm:$0xff]
    %v43 = vld [vmem:[%s1 + $0x68] sm:$0xff]
    %v44 = vld [vmem:[%s1 + $0x70] sm:$0xff]
    %v45 = vld [vmem:[%s1 + $0x78] sm:$0xff]
    %v46 = vld [vmem:[%s1 + $0x80] sm:$0xff]
    %v47 = vld [vmem:[%s1 + $0x88] sm:$0xff]
    %v48 = vld [vmem:[%s1 + $0x90] sm:$0xff]
    %v49 = vld [vmem:[%s1 + $0x98] sm:$0xff]
    %v50 = vld [vmem:[%s1 + $0xa0] sm:$0xff]
    %v51 = vld [vmem:[%s1 + $0xa8] sm:$0xff]
    %v52 = vld [vmem:[%s1 + $0xb0] sm:$0xff]
    %v53 = vld [vmem:[%s1 + $0xb8] sm:$0xff]
    %v54 = vld [vmem:[%s1 + $0xc0] sm:$0xff]
    %v55 = vld [vmem:[%s1 + $0xc8] sm:$0xff]
    %v56 = vld [vmem:[%s1 + $0xd0] sm:$0xff]
    %v57 = vld [vmem:[%s1 + $0xd8] sm:$0xff]
    %v58 = vld [vmem:[%s1 + $0xe0] sm:$0xff]
    %v59 = vld [vmem:[%s1 + $0xe8] sm:$0xff]
    %v60 = vld [vmem:[%s1 + $0xf0] sm:$0xff]
    %v61 = vld [vmem:[%s1 + $0xf8] sm:$0xff]
    %v62 = vld [vmem:[%s1 + $0x100] sm:$0xff]
    %v63 = vld [vmem:[%s1 + $0x108] sm:$0xff]
    %v64 = vld [vmem:[%s1 + $0x110] sm:$0xff]
    %v65 = vld [vmem:[%s1 + $0x118] sm:$0xff]
    %v66 = vld [vmem:[%s1 + $0x120] sm:$0xff]
    %v67 = vld [vmem:[%s1 + $0x128] sm:$0xff]
    %v68 = vld [vmem:[%s1 + $0x130] sm:$0xff]
    %v69 = vld [vmem:[%s1 + $0x138] sm:$0xff]
    %v70 = vld [vmem:[%s1 + $0x140] sm:$0xff]
    %v71 = vld [vmem:[%s1 + $0x148] sm:$0xff]
    %v72 = vld [vmem:[%s1 + $0x150] sm:$0xff]
    %v73 = vld [vmem:[%s1 + $0x158] sm:$0xff]
    %v74 = vld [vmem:[%s1 + $0x160] sm:$0xff]
    %v75 = vld [vmem:[%s1 + $0x168] sm:$0xff]
    %v76 = vld [vmem:[%s1 + $0x170] sm:$0xff]
    %v77 = vld [vmem:[%s1 + $0x178] sm:$0xff]
    %v78 = vld [vmem:[%s1 + $0x180] sm:$0xff]
    %v79 = vld [vmem:[%s1 + $0x188] sm:$0xff]
    %v80 = vld [vmem:[%s1 + $0x190] sm:$0xff]
    %v81 = vld [vmem:[%s1 + $0x198] sm:$0xff]
    %v82 = vld [vmem:[%s1 + $0x1a0] sm:$0xff]
    %v83 = vld [vmem:[%s1 + $0x1a8] sm:$0xff]
    %v84 = vld [vmem:[%s1 + $0x1b0] sm:$0xff]
    %v85 = vld [vmem:[%s1 + $0x1b8] sm:$0xff]
    %v86 = vld [vmem:[%s1 + $0x1c0] sm:$0xff]
    %v87 = vld [vmem:[%s1 + $0x1c8] sm:$0xff]
    %v88 = vld [vmem:[%s1 + $0x1d0] sm:$0xff]
    %v89 = vld [vmem:[%s1 + $0x1d8] sm:$0xff]
    %v90 = vld [vmem:[%s1 + $0x1e0] sm:$0xff]
    %v91 = vld [vmem:[%s1 + $0x1e8] sm:$0xff]
    %v92 = vld [vmem:[%s1 + $0x1f0] sm:$0xff]
    %v93 = vld [vmem:[%s1 + $0x1f8] sm:$0xff]
    %v94 = vld [vmem:[%s2] sm:$0x3]
    %v96 = vperm.slane %v94, 0
    %v97 = vperm.slane %v94, 1
    %v164 = vunpack.c.l.b16 %v30
    %v165 = vunpack.c.h.b16 %v30
    %v166 = vunpack.c.l.b16 %v31
    %v167 = vunpack.c.h.b16 %v31
    %v168 = vunpack.c.l.b16 %v32
    %v169 = vunpack.c.h.b16 %v32
    %v170 = vunpack.c.l.b16 %v33
    %v171 = vunpack.c.h.b16 %v33
    %v172 = vunpack.c.l.b16 %v34
    %v173 = vunpack.c.h.b16 %v34
    %v174 = vunpack.c.l.b16 %v35
    %v175 = vunpack.c.h.b16 %v35
    %v176 = vunpack.c.l.b16 %v36
    %v177 = vunpack.c.h.b16 %v36
    %v178 = vunpack.c.l.b16 %v37
    %v179 = vunpack.c.h.b16 %v37
    %v180 = vunpack.c.l.b16 %v38
    %v181 = vunpack.c.h.b16 %v38
    %v182 = vunpack.c.l.b16 %v39
    %v183 = vunpack.c.h.b16 %v39
    %v184 = vunpack.c.l.b16 %v40
    %v185 = vunpack.c.h.b16 %v40
    %v186 = vunpack.c.l.b16 %v41
    %v187 = vunpack.c.h.b16 %v41
    %v188 = vunpack.c.l.b16 %v42
    %v189 = vunpack.c.h.b16 %v42
    %v190 = vunpack.c.l.b16 %v43
    %v191 = vunpack.c.h.b16 %v43
    %v192 = vunpack.c.l.b16 %v44
    %v193 = vunpack.c.h.b16 %v44
    %v194 = vunpack.c.l.b16 %v45
    %v195 = vunpack.c.h.b16 %v45
    %v196 = vunpack.c.l.b16 %v46
    %v197 = vunpack.c.h.b16 %v46
    %v198 = vunpack.c.l.b16 %v47
    %v199 = vunpack.c.h.b16 %v47
    %v200 = vunpack.c.l.b16 %v48
    %v201 = vunpack.c.h.b16 %v48
    %v202 = vunpack.c.l.b16 %v49
    %v203 = vunpack.c.h.b16 %v49
    %v204 = vunpack.c.l.b16 %v50
    %v205 = vunpack.c.h.b16 %v50
    %v206 = vunpack.c.l.b16 %v51
    %v207 = vunpack.c.h.b16 %v51
    %v208 = vunpack.c.l.b16 %v52
    %v209 = vunpack.c.h.b16 %v52
    %v210 = vunpack.c.l.b16 %v53
    %v211 = vunpack.c.h.b16 %v53
    %v212 = vunpack.c.l.b16 %v54
    %v213 = vunpack.c.h.b16 %v54
    %v214 = vunpack.c.l.b16 %v55
    %v215 = vunpack.c.h.b16 %v55
    %v216 = vunpack.c.l.b16 %v56
    %v217 = vunpack.c.h.b16 %v56
    %v218 = vunpack.c.l.b16 %v57
    %v219 = vunpack.c.h.b16 %v57
    %v220 = vunpack.c.l.b16 %v58
    %v221 = vunpack.c.h.b16 %v58
    %v222 = vunpack.c.l.b16 %v59
    %v223 = vunpack.c.h.b16 %v59
    %v224 = vunpack.c.l.b16 %v60
    %v225 = vunpack.c.h.b16 %v60
    %v226 = vunpack.c.l.b16 %v61
    %v227 = vunpack.c.h.b16 %v61
    %v228 = vunpack.c.l.b16 %v62
    %v229 = vunpack.c.h.b16 %v62
    %v230 = vunpack.c.l.b16 %v63
    %v231 = vunpack.c.h.b16 %v63
    %v232 = vunpack.c.l.b16 %v64
    %v233 = vunpack.c.h.b16 %v64
    %v234 = vunpack.c.l.b16 %v65
    %v235 = vunpack.c.h.b16 %v65
    %v236 = vunpack.c.l.b16 %v66
    %v237 = vunpack.c.h.b16 %v66
    %v238 = vunpack.c.l.b16 %v67
    %v239 = vunpack.c.h.b16 %v67
    %v240 = vunpack.c.l.b16 %v68
    %v241 = vunpack.c.h.b16 %v68
    %v242 = vunpack.c.l.b16 %v69
    %v243 = vunpack.c.h.b16 %v69
    %v244 = vunpack.c.l.b16 %v70
    %v245 = vunpack.c.h.b16 %v70
    %v246 = vunpack.c.l.b16 %v71
    %v247 = vunpack.c.h.b16 %v71
    %v248 = vunpack.c.l.b16 %v72
    %v249 = vunpack.c.h.b16 %v72
    %v250 = vunpack.c.l.b16 %v73
    %v251 = vunpack.c.h.b16 %v73
    %v252 = vunpack.c.l.b16 %v74
    %v253 = vunpack.c.h.b16 %v74
    %v254 = vunpack.c.l.b16 %v75
    %v255 = vunpack.c.h.b16 %v75
    %v256 = vunpack.c.l.b16 %v76
    %v257 = vunpack.c.h.b16 %v76
    %v258 = vunpack.c.l.b16 %v77
    %v259 = vunpack.c.h.b16 %v77
    %v260 = vunpack.c.l.b16 %v78
    %v261 = vunpack.c.h.b16 %v78
    %v262 = vunpack.c.l.b16 %v79
    %v263 = vunpack.c.h.b16 %v79
    %v264 = vunpack.c.l.b16 %v80
    %v265 = vunpack.c.h.b16 %v80
    %v266 = vunpack.c.l.b16 %v81
    %v267 = vunpack.c.h.b16 %v81
    %v268 = vunpack.c.l.b16 %v82
    %v269 = vunpack.c.h.b16 %v82
    %v270 = vunpack.c.l.b16 %v83
    %v271 = vunpack.c.h.b16 %v83
    %v272 = vunpack.c.l.b16 %v84
    %v273 = vunpack.c.h.b16 %v84
    %v274 = vunpack.c.l.b16 %v85
    %v275 = vunpack.c.h.b16 %v85
    %v276 = vunpack.c.l.b16 %v86
    %v277 = vunpack.c.h.b16 %v86
    %v278 = vunpack.c.l.b16 %v87
    %v279 = vunpack.c.h.b16 %v87
    %v280 = vunpack.c.l.b16 %v88
    %v281 = vunpack.c.h.b16 %v88
    %v282 = vunpack.c.l.b16 %v89
    %v283 = vunpack.c.h.b16 %v89
    %v284 = vunpack.c.l.b16 %v90
    %v285 = vunpack.c.h.b16 %v90
    %v286 = vunpack.c.l.b16 %v91
    %v287 = vunpack.c.h.b16 %v91
    %v288 = vunpack.c.l.b16 %v92
    %v289 = vunpack.c.h.b16 %v92
    %v290 = vunpack.c.l.b16 %v93
    %v291 = vunpack.c.h.b16 %v93
    %v292 = vpack.c.b16 %v166, %v164
    %v293 = vpack.c.b16 %v167, %v165
    %v294 = vpack.c.b16 %v170, %v168
    %v295 = vpack.c.b16 %v171, %v169
    %v296 = vpack.c.b16 %v174, %v172
    %v297 = vpack.c.b16 %v175, %v173
    %v298 = vpack.c.b16 %v178, %v176
    %v299 = vpack.c.b16 %v179, %v177
    %v300 = vpack.c.b16 %v182, %v180
    %v301 = vpack.c.b16 %v183, %v181
    %v302 = vpack.c.b16 %v186, %v184
    %v303 = vpack.c.b16 %v187, %v185
    %v304 = vpack.c.b16 %v190, %v188
    %v305 = vpack.c.b16 %v191, %v189
    %v306 = vpack.c.b16 %v194, %v192
    %v307 = vpack.c.b16 %v195, %v193
    %v308 = vpack.c.b16 %v198, %v196
    %v309 = vpack.c.b16 %v199, %v197
    %v310 = vpack.c.b16 %v202, %v200
    %v311 = vpack.c.b16 %v203, %v201
    %v312 = vpack.c.b16 %v206, %v204
    %v313 = vpack.c.b16 %v207, %v205
    %v314 = vpack.c.b16 %v210, %v208
    %v315 = vpack.c.b16 %v211, %v209
    %v316 = vpack.c.b16 %v214, %v212
    %v317 = vpack.c.b16 %v215, %v213
    %v318 = vpack.c.b16 %v218, %v216
    %v319 = vpack.c.b16 %v219, %v217
    %v320 = vpack.c.b16 %v222, %v220
    %v321 = vpack.c.b16 %v223, %v221
    %v322 = vpack.c.b16 %v226, %v224
    %v323 = vpack.c.b16 %v227, %v225
    %v324 = vpack.c.b16 %v230, %v228
    %v325 = vpack.c.b16 %v231, %v229
    %v326 = vpack.c.b16 %v234, %v232
    %v327 = vpack.c.b16 %v235, %v233
    %v328 = vpack.c.b16 %v238, %v236
    %v329 = vpack.c.b16 %v239, %v237
    %v330 = vpack.c.b16 %v242, %v240
    %v331 = vpack.c.b16 %v243, %v241
    %v332 = vpack.c.b16 %v246, %v244
    %v333 = vpack.c.b16 %v247, %v245
    %v334 = vpack.c.b16 %v250, %v248
    %v335 = vpack.c.b16 %v251, %v249
    %v336 = vpack.c.b16 %v254, %v252
    %v337 = vpack.c.b16 %v255, %v253
    %v338 = vpack.c.b16 %v258, %v256
    %v339 = vpack.c.b16 %v259, %v257
    %v340 = vpack.c.b16 %v262, %v260
    %v341 = vpack.c.b16 %v263, %v261
    %v342 = vpack.c.b16 %v266, %v264
    %v343 = vpack.c.b16 %v267, %v265
    %v344 = vpack.c.b16 %v270, %v268
    %v345 = vpack.c.b16 %v271, %v269
    %v346 = vpack.c.b16 %v274, %v272
    %v347 = vpack.c.b16 %v275, %v273
    %v348 = vpack.c.b16 %v278, %v276
    %v349 = vpack.c.b16 %v279, %v277
    %v350 = vpack.c.b16 %v282, %v280
    %v351 = vpack.c.b16 %v283, %v281
    %v352 = vpack.c.b16 %v286, %v284
    %v353 = vpack.c.b16 %v287, %v285
    %v354 = vpack.c.b16 %v290, %v288
    %v355 = vpack.c.b16 %v291, %v289
    %420 = vmatpush.bf16.msra.mxu0 %v306
    %421 = vmatpush.bf16.msra.mxu0 %v304
    %422 = vmatpush.bf16.msra.mxu0 %v302
    %423 = vmatpush.bf16.msra.mxu0 %v300
    %424 = vmatpush.bf16.msra.mxu0 %v298
    %425 = vmatpush.bf16.msra.mxu0 %v296
    %426 = vmatpush.bf16.msra.mxu0 %v294
    %427 = vmatpush.bf16.msra.mxu0 %v292
    %428 = vmatmul.bf16.gmra.mxu0 %v26
    %v429 = vpop.f32.mrf.mxu0
    %v430 = vadd.f32 %v96, %v429
    %v431 = vpop.f32.mrf.mxu0
    %432 = vdwg.mxu0
    %433 = vmatpush.bf16.msra.mxu0 %v322
    %434 = vmatpush.bf16.msra.mxu0 %v320
    %435 = vmatpush.bf16.msra.mxu0 %v318
    %436 = vmatpush.bf16.msra.mxu0 %v316
    %437 = vmatpush.bf16.msra.mxu0 %v314
    %438 = vmatpush.bf16.msra.mxu0 %v312
    %439 = vmatpush.bf16.msra.mxu0 %v310
    %440 = vmatpush.bf16.msra.mxu0 %v308
    %441 = vmatmul.bf16.gmra.mxu0 %v27
    %v442 = vpop.f32.mrf.mxu0
    %v443 = vadd.f32 %v430, %v442
    %v444 = vpop.f32.mrf.mxu0
    %445 = vdwg.mxu0
    %446 = vmatpush.bf16.msra.mxu0 %v338
    %447 = vmatpush.bf16.msra.mxu0 %v336
    %448 = vmatpush.bf16.msra.mxu0 %v334
    %449 = vmatpush.bf16.msra.mxu0 %v332
    %450 = vmatpush.bf16.msra.mxu0 %v330
    %451 = vmatpush.bf16.msra.mxu0 %v328
    %452 = vmatpush.bf16.msra.mxu0 %v326
    %453 = vmatpush.bf16.msra.mxu0 %v324
    %454 = vmatmul.bf16.gmra.mxu0 %v28
    %v455 = vpop.f32.mrf.mxu0
    %v456 = vadd.f32 %v443, %v455
    %v457 = vpop.f32.mrf.mxu0
    %458 = vdwg.mxu0
    %459 = vmatpush.bf16.msra.mxu0 %v354
    %460 = vmatpush.bf16.msra.mxu0 %v352
    %461 = vmatpush.bf16.msra.mxu0 %v350
    %462 = vmatpush.bf16.msra.mxu0 %v348
    %463 = vmatpush.bf16.msra.mxu0 %v346
    %464 = vmatpush.bf16.msra.mxu0 %v344
    %465 = vmatpush.bf16.msra.mxu0 %v342
    %466 = vmatpush.bf16.msra.mxu0 %v340
    %467 = vmatmul.bf16.gmra.mxu0 %v29
    %v468 = vpop.f32.mrf.mxu0
    %v469 = vadd.f32 %v456, %v468
    %v470 = vpop.f32.mrf.mxu0
    %471 = vdwg.mxu0
    %472 = vmatpush.bf16.msra.mxu0 %v307
    %473 = vmatpush.bf16.msra.mxu0 %v305
    %474 = vmatpush.bf16.msra.mxu0 %v303
    %475 = vmatpush.bf16.msra.mxu0 %v301
    %476 = vmatpush.bf16.msra.mxu0 %v299
    %477 = vmatpush.bf16.msra.mxu0 %v297
    %478 = vmatpush.bf16.msra.mxu0 %v295
    %479 = vmatpush.bf16.msra.mxu0 %v293
    %480 = vmatmul.bf16.gmra.mxu0 %v26
    %v481 = vpop.f32.mrf.mxu0
    %v482 = vadd.f32 %v97, %v481
    %v483 = vpop.f32.mrf.mxu0
    %484 = vdwg.mxu0
    %485 = vmatpush.bf16.msra.mxu0 %v323
    %486 = vmatpush.bf16.msra.mxu0 %v321
    %487 = vmatpush.bf16.msra.mxu0 %v319
    %488 = vmatpush.bf16.msra.mxu0 %v317
    %489 = vmatpush.bf16.msra.mxu0 %v315
    %490 = vmatpush.bf16.msra.mxu0 %v313
    %491 = vmatpush.bf16.msra.mxu0 %v311
    %492 = vmatpush.bf16.msra.mxu0 %v309
    %493 = vmatmul.bf16.gmra.mxu0 %v27
    %v494 = vpop.f32.mrf.mxu0
    %v495 = vadd.f32 %v482, %v494
    %v496 = vpop.f32.mrf.mxu0
    %497 = vdwg.mxu0
    %498 = vmatpush.bf16.msra.mxu0 %v339
    %499 = vmatpush.bf16.msra.mxu0 %v337
    %500 = vmatpush.bf16.msra.mxu0 %v335
    %501 = vmatpush.bf16.msra.mxu0 %v333
    %502 = vmatpush.bf16.msra.mxu0 %v331
    %503 = vmatpush.bf16.msra.mxu0 %v329
    %504 = vmatpush.bf16.msra.mxu0 %v327
    %505 = vmatpush.bf16.msra.mxu0 %v325
    %506 = vmatmul.bf16.gmra.mxu0 %v28
    %v507 = vpop.f32.mrf.mxu0
    %v508 = vadd.f32 %v495, %v507
    %v509 = vpop.f32.mrf.mxu0
    %510 = vdwg.mxu0
    %511 = vmatpush.bf16.msra.mxu0 %v355
    %512 = vmatpush.bf16.msra.mxu0 %v353
    %513 = vmatpush.bf16.msra.mxu0 %v351
    %514 = vmatpush.bf16.msra.mxu0 %v349
    %515 = vmatpush.bf16.msra.mxu0 %v347
    %516 = vmatpush.bf16.msra.mxu0 %v345
    %517 = vmatpush.bf16.msra.mxu0 %v343
    %518 = vmatpush.bf16.msra.mxu0 %v341
    %519 = vmatmul.bf16.gmra.mxu0 %v29
    %v520 = vpop.f32.mrf.mxu0
    %v521 = vadd.f32 %v508, %v520
    %v522 = vpop.f32.mrf.mxu0
    %523 = vdwg.mxu0
    %vm524 = vcmask 1041408
    %v525 = vsel %vm524, %v469, -inf
    %vm526 = vcmask 582656
    %v527 = vsel %vm526, %v521, -inf
    %v528 = vmax.f32 %v525, %v527
    %529 = vmax.xlane.f32.xlu0 %v528
    %v530 = vpop.xlane.xlu0 %529
    %v531 = vsub.f32 %v469, %v530
    %v532 = vsub.f32 %v521, %v530
    %v533 = vmul.f32 %v531, 1.442695
    %v534 = vpow.pop %v533
    %v535 = vmul.f32 %v532, 1.442695
    %v536 = vpow.pop %v535
    %v537 = vsel %vm524, %v534, 0.0
    %v538 = vsel %vm526, %v536, 0.0
    %v539 = vadd.f32 %v537, %v538
    %540 = vadd.xlane.f32.xlu0 %v539
    %v541 = vpop.xlane.xlu0 %540
    %v542 = vrcp.pop %v541
    %v543 = vmul.f32 %v541, %v542
    %v544 = vsub.f32 1.0, %v543
    %v545 = vmul.f32 %v542, %v544
    %v546 = vadd.f32 %v542, %v545
    %vm547 = vweird.f32 %v541
    %vm548 = vweird.f32 %v542
    %vm549 = vmor %vm547, %vm548
    %v550 = vsel %vm549, %v542, %v546
    %v551 = vand.u32 2147483647, %v541
    %vm552 = vcmp.eq.f32.partialorder %v551, 8.507059e+37
    %v553 = vand.u32 %v541, 2147483648
    %v554 = vor.u32 1.1754944e-38, %v553
    %v555 = vsel %vm552, %v554, %v550
    %v556 = vmul.f32 1.0, %v555
    %v557 = vmul.f32 %v534, %v556
    %v558 = vmul.f32 %v536, %v556
    %v561 = vrot.slane %v558, 6
    %v562 = vsel %vm524, %v557, %v561
    %vm564 = vcmask 584706
    %vm565 = vmor %vm564, %vm524
    %566 = vst.msk [vmem:[#allocation2] sm:$0xf] %vm565, %v562
    // Predicated region
    $region14: #{tpu_custom_call.1} parent=1 // pred_check
      _
    $region15: #{tpu_custom_call.1} parent=1 // pred_check_branch
      %568 = sbr.rel (0) target = $region17
    $region16: #{tpu_custom_call.1} parent=1 // pred_region
      %570 = vsyncadd [#allocation3], 0
      %s572 = sshll.u32 [#allocation2], 4
      %s573 = int_to_ptr.vmem [resolvable:$true] %s572
      %s574 = sshll.u32 %s3, 4
      %s575 = int_to_ptr.hbm [resolvable:$true] %s574
      %577 = dma.vmem_to_hbm [thread:$0]  %s573, 64, %s575, [#allocation3]
    $region17: #{tpu_custom_call.1} parent=1 // pred_fallthru
      _
    // Predicated region
    $region18: #{tpu_custom_call.1} parent=1 // pred_check
      _
    $region19: #{tpu_custom_call.1} parent=1 // pred_check_branch
      %579 = sbr.rel (0) target = $region21
    $region20: #{tpu_custom_call.1} parent=1 // pred_region
      %581 = dma.done [#allocation3], 64
    $region21: #{tpu_custom_call.1} parent=1 // pred_fallthru
      _
    %582 = vsyncpa [#allocation3], 1

</llo_original>
